<compile_context>
chip_gen: v7x
topology: tpu7x:2x2x1
jax: 0.10.0
libtpu: 0.0.40
codegen_flags: <defaults>
</compile_context>

<pallas_src>
import functools

import jax
import jax.numpy as jnp
from jax.experimental import pallas as pl
from jax.experimental.pallas import tpu as pltpu


def _round_up(v, m):
    return ((v + m - 1) // m) * m


def _choose_tb(batch):
    """Batch tile: >=8-aligned, minimal pad waste, prefer >=2 grid steps (v7x)."""
    if batch <= 128:
        return _round_up(batch, 8)
    best_key, best_tb = None, None
    for tb in (128, 256, 512):
        pb = _round_up(batch, tb)
        key = (
            0 if pb // tb >= 2 else 1,  # prefer >=2 steps so v7x's 2 TCs both work
            pb - batch,                 # then minimal padded-batch waste
            -tb,                        # then bigger tiles (amortize ~0.35us/step)
        )
        if best_key is None or key < best_key:
            best_key, best_tb = key, tb
    return best_tb


def _mlp_kernel(*refs, nlayers, activate_last, cast_dtype):
    """Fused MLP: chain all Linear(+ReLU) layers on one (TB, D_pad0) tile.

    refs = (x_ref, w_0..w_{L-1}, b_0..b_{L-1}, o_ref)
      x_ref : (TB, K_pad_0)           activation tile (zero-padded lanes)
      w_i   : (K_pad_i, N_pad_i)      per-layer padded weight (VMEM-resident)
      b_i   : (1, N_pad_i)            per-layer padded bias, f32
      o_ref : (TB, N_pad_{L-1})       lane-dense output tile
    """
    x_ref = refs[0]
    w_refs = refs[1:1 + nlayers]
    b_refs = refs[1 + nlayers:1 + 2 * nlayers]
    o_ref = refs[1 + 2 * nlayers]

    h = x_ref[...]                       # f32
    for i in range(nlayers):             # static unroll: small fixed layer count
        lhs = h if h.dtype == cast_dtype else h.astype(cast_dtype)
        # MXU matmul with f32 accumulation (weights already in their final dtype).
        h = jnp.dot(lhs, w_refs[i][...], preferred_element_type=jnp.float32)
        h = h + b_refs[i][...]           # (1, N_pad_i) broadcasts over TB rows
        if i < nlayers - 1 or activate_last:
            h = jnp.maximum(h, 0.0)      # activation_fn = ReLU
    o_ref[...] = h.astype(o_ref.dtype)


def fused_mlp(x, w_list, b_list, *, d_pads, nlayers, activate_last, out_dim):
    """Run the whole MLP as a single Pallas call.

    Zero-padding is exact: padded weight rows/cols and bias lanes are zero, so
    padded activation lanes stay zero through every layer (ReLU preserves 0);
    the wrapper slices the final (batch, out_dim) block from the padded output.
    """
    batch, in_dim = x.shape
    assert in_dim <= d_pads[0]

    tb = _choose_tb(batch)
    padded_batch = _round_up(batch, tb)

    # Single conditional pad (avoids extra HBM round-trips when already aligned).
    pad_rows = padded_batch - batch
    pad_cols = d_pads[0] - in_dim
    if pad_rows or pad_cols:
        x = jnp.pad(x, ((0, pad_rows), (0, pad_cols)))
    grid = (padded_batch // tb,)

    wdtype = w_list[0].dtype
    kernel = functools.partial(
        _mlp_kernel, nlayers=nlayers, activate_last=activate_last,
        cast_dtype=wdtype)

    # Advisory cost hint for XLA: real executed padded work / real dtypes.
    flops = 2 * padded_batch * sum(int(w.shape[0]) * int(w.shape[1]) for w in w_list)
    w_bytes = sum(int(w.size) * w.dtype.itemsize for w in w_list)
    b_bytes = sum(int(b.size) * b.dtype.itemsize for b in b_list)
    bytes_accessed = (int(x.size) * x.dtype.itemsize + w_bytes + b_bytes
                      + padded_batch * d_pads[-1] * x.dtype.itemsize)

    # VMEM budget: single-buffered weights/biases + double-buffered x/out blocks
    # + live activation temps, with 2x headroom.
    # TODO(synk): if this outgrows ~48 MiB (v7x has 64 MiB physical VMEM), switch
    # to streaming per-layer weights from HBM (pl.ANY + emit_pipeline).
    io_bytes = 2 * tb * (d_pads[0] + d_pads[-1]) * 4
    live_bytes = 2 * tb * max(d_pads) * 4
    need = w_bytes + b_bytes + io_bytes + live_bytes
    vmem_limit = int(min(max(2 * need, 32 << 20), 128 << 20))

    out_shape = jax.ShapeDtypeStruct((padded_batch, d_pads[-1]), x.dtype)
    x_spec = pl.BlockSpec((tb, d_pads[0]), lambda i: (i, 0))
    out_spec = pl.BlockSpec((tb, d_pads[-1]), lambda i: (i, 0))

    compiler_params = pltpu.CompilerParams(
        dimension_semantics=("parallel",),   # shard batch grid across v7x's 2 TCs
        vmem_limit_bytes=vmem_limit)
    cost = pl.CostEstimate(flops=flops, transcendentals=0,
                           bytes_accessed=bytes_accessed)

    # Weights/biases: constant block index -> fetched once, stay VMEM-resident.
    # Buffered(1) drops the useless second pipeline buffer (halves weight VMEM);
    # fall back to default buffering if this build rejects single-buffer mode.
    last_err = None
    for single_buffer in (True, False):
        kw = {"pipeline_mode": pl.Buffered(1)} if single_buffer else {}
        in_specs = [x_spec]
        in_specs += [pl.BlockSpec(w.shape, lambda i: (0, 0), **kw) for w in w_list]
        in_specs += [pl.BlockSpec(b.shape, lambda i: (0, 0), **kw) for b in b_list]
        try:
            out = pl.pallas_call(
                kernel,
                out_shape=out_shape,
                grid=grid,
                in_specs=in_specs,
                out_specs=out_spec,
                compiler_params=compiler_params,
                cost_estimate=cost,
            )(x, *w_list, *b_list)
            return out[:batch, :out_dim]
        except Exception as e:  # fallback path for builds without Buffered(1)
            last_err = e
    raise last_err


class FeedForwardNet:
    """JAX/Pallas port of the PyTorch FeedForwardNet (ReLU MLP)."""

    def __init__(self, in_shape, units, key, activate_last=False, use_bf16=False):
        assert len(units) >= 1
        self.activate_last = activate_last
        self.nlayers = len(units)
        self.units = list(units)
        self.in_shape = in_shape
        self.use_bf16 = use_bf16

        # Raw (unpadded) params, identical semantics to nn.Linear (W^T layout).
        self.params = []
        ni = in_shape
        for no in units:
            key, wk, bk = jax.random.split(key, 3)
            bound = 1.0 / float(ni) ** 0.5
            w = jax.random.uniform(wk, (ni, no), jnp.float32, -bound, bound)
            b = jax.random.uniform(bk, (no,), jnp.float32, -bound, bound)
            self.params.append((w, b))
            ni = no

        # Per-layer zero-padding to 128-lane multiples (lane-dense compute,
        # no square max-width blow-up for heterogeneous layers).
        # TODO(synk): for true dims >=256 on v6e/v7x, 256-multiple padding can
        # fill the 256x256 MXU better; kept 128 to avoid waste on small nets.
        dims = [in_shape] + self.units
        self.d_pads = [_round_up(d, 128) for d in dims]

        wdtype = jnp.bfloat16 if use_bf16 else jnp.float32
        self.w_list, self.b_list = [], []
        for i, (w, b) in enumerate(self.params):
            kp, np_ = self.d_pads[i], self.d_pads[i + 1]
            wi = jnp.zeros((kp, np_), jnp.float32).at[:w.shape[0], :w.shape[1]].set(w)
            bi = jnp.zeros((1, np_), jnp.float32).at[0, :b.shape[0]].set(b)
            self.w_list.append(wi.astype(wdtype))   # pre-cast ONCE at pack time
            self.b_list.append(bi)                  # biases stay f32 (epilogue)

    def __call__(self, x):
        # Note: use_bf16=True trades the 1e-5 f32 check for ~3-4x MXU rate.
        return fused_mlp(
            x, self.w_list, self.b_list, d_pads=self.d_pads,
            nlayers=self.nlayers, activate_last=self.activate_last,
            out_dim=self.units[-1])


def _reference(x, params, activate_last):
    """Pure-JAX reference for correctness check."""
    n = len(params)
    for i, (w, b) in enumerate(params):
        x = x @ w + b
        if i < n - 1 or activate_last:
            x = jnp.maximum(x, 0.0)
    return x


if __name__ == "__main__":
    key = jax.random.PRNGKey(0)
    key, xk, pk = jax.random.split(key, 3)

    # Matches the docstring example: FeedForwardNet(16, [32, 32, 1]).
    batch, in_shape = 8, 16
    units = [32, 32, 1]

    net = FeedForwardNet(in_shape, units, pk, activate_last=False)
    x = jax.random.normal(xk, (batch, in_shape), jnp.float32)

    out = jax.block_until_ready(net(x))
    ref = _reference(x, net.params, net.activate_last)
    assert out.shape == (batch, units[-1]), out.shape
    assert jnp.allclose(out, ref, atol=1e-5, rtol=1e-5), "mismatch vs reference"

    # Second config: heterogeneous widths + activate_last + non-tile-aligned
    # batch; exercises per-layer padding and the tb/grid selection path.
    key, xk2, pk2 = jax.random.split(key, 3)
    net2 = FeedForwardNet(24, [64, 8], pk2, activate_last=True)
    x2 = jax.random.normal(xk2, (300, 24), jnp.float32)
    out2 = jax.block_until_ready(net2(x2))
    ref2 = _reference(x2, net2.params, net2.activate_last)
    assert out2.shape == (300, 8), out2.shape
    assert jnp.allclose(out2, ref2, atol=1e-5, rtol=1e-5), "mismatch vs ref (cfg2)"

    print("KERNEL_OK")
</pallas_src>

<mosaic_0001>
module attributes {stable_mosaic.version = 11 : i64} {
  func.func @_mlp_kernel(%arg0: i32, %arg1: memref<8x128xf32, #tpu.memory_space<vmem>>, %arg2: memref<128x128xf32, #tpu.memory_space<vmem>>, %arg3: memref<128x128xf32, #tpu.memory_space<vmem>>, %arg4: memref<128x128xf32, #tpu.memory_space<vmem>>, %arg5: memref<1x128xf32, #tpu.memory_space<vmem>>, %arg6: memref<1x128xf32, #tpu.memory_space<vmem>>, %arg7: memref<1x128xf32, #tpu.memory_space<vmem>>, %arg8: memref<8x128xf32, #tpu.memory_space<vmem>>) attributes {dimension_semantics = [#tpu.dimension_semantics<parallel>], iteration_bounds = array<i64: 1>, scalar_prefetch = 0 : i64, scratch_operands = 0 : i64, tpu.core_type = #tpu.core_type<tc>, window_params = [{transform_indices = @transform_0, window_bounds = array<i64: 8, 128>}, {pipeline_mode = #tpu.pipeline_mode<synchronous>, transform_indices = @transform_1, window_bounds = array<i64: 128, 128>}, {pipeline_mode = #tpu.pipeline_mode<synchronous>, transform_indices = @transform_2, window_bounds = array<i64: 128, 128>}, {pipeline_mode = #tpu.pipeline_mode<synchronous>, transform_indices = @transform_3, window_bounds = array<i64: 128, 128>}, {pipeline_mode = #tpu.pipeline_mode<synchronous>, transform_indices = @transform_4, window_bounds = array<i64: 1, 128>}, {pipeline_mode = #tpu.pipeline_mode<synchronous>, transform_indices = @transform_5, window_bounds = array<i64: 1, 128>}, {pipeline_mode = #tpu.pipeline_mode<synchronous>, transform_indices = @transform_6, window_bounds = array<i64: 1, 128>}, {transform_indices = @transform_7, window_bounds = array<i64: 8, 128>}]} {
    %c0 = arith.constant 0 : index
    %c0_0 = arith.constant 0 : index
    %0 = vector.load %arg1[%c0, %c0_0] : memref<8x128xf32, #tpu.memory_space<vmem>>, vector<8x128xf32>
    %c0_1 = arith.constant 0 : index
    %c0_2 = arith.constant 0 : index
    %1 = vector.load %arg2[%c0_1, %c0_2] : memref<128x128xf32, #tpu.memory_space<vmem>>, vector<128x128xf32>
    %cst = arith.constant dense<0.000000e+00> : vector<8x128xf32>
    %2 = tpu.matmul %0, %1, %cst {dimension_numbers = #tpu.dot_dimension_numbers<[1], [0], [0], [1], [0, 0, 1, 1], [], []>} : vector<8x128xf32>, vector<128x128xf32>, vector<8x128xf32> -> vector<8x128xf32>
    %c0_3 = arith.constant 0 : index
    %c0_4 = arith.constant 0 : index
    %3 = vector.load %arg5[%c0_3, %c0_4] : memref<1x128xf32, #tpu.memory_space<vmem>>, vector<1x128xf32>
    %4 = vector.broadcast %3 : vector<1x128xf32> to vector<8x128xf32>
    %5 = arith.addf %2, %4 : vector<8x128xf32>
    %cst_5 = arith.constant 0.000000e+00 : f32
    %6 = vector.broadcast %cst_5 : f32 to vector<8x128xf32>
    %7 = arith.maximumf %5, %6 : vector<8x128xf32>
    %c0_6 = arith.constant 0 : index
    %c0_7 = arith.constant 0 : index
    %8 = vector.load %arg3[%c0_6, %c0_7] : memref<128x128xf32, #tpu.memory_space<vmem>>, vector<128x128xf32>
    %cst_8 = arith.constant dense<0.000000e+00> : vector<8x128xf32>
    %9 = tpu.matmul %7, %8, %cst_8 {dimension_numbers = #tpu.dot_dimension_numbers<[1], [0], [0], [1], [0, 0, 1, 1], [], []>} : vector<8x128xf32>, vector<128x128xf32>, vector<8x128xf32> -> vector<8x128xf32>
    %c0_9 = arith.constant 0 : index
    %c0_10 = arith.constant 0 : index
    %10 = vector.load %arg6[%c0_9, %c0_10] : memref<1x128xf32, #tpu.memory_space<vmem>>, vector<1x128xf32>
    %11 = vector.broadcast %10 : vector<1x128xf32> to vector<8x128xf32>
    %12 = arith.addf %9, %11 : vector<8x128xf32>
    %cst_11 = arith.constant 0.000000e+00 : f32
    %13 = vector.broadcast %cst_11 : f32 to vector<8x128xf32>
    %14 = arith.maximumf %12, %13 : vector<8x128xf32>
    %c0_12 = arith.constant 0 : index
    %c0_13 = arith.constant 0 : index
    %15 = vector.load %arg4[%c0_12, %c0_13] : memref<128x128xf32, #tpu.memory_space<vmem>>, vector<128x128xf32>
    %cst_14 = arith.constant dense<0.000000e+00> : vector<8x128xf32>
    %16 = tpu.matmul %14, %15, %cst_14 {dimension_numbers = #tpu.dot_dimension_numbers<[1], [0], [0], [1], [0, 0, 1, 1], [], []>} : vector<8x128xf32>, vector<128x128xf32>, vector<8x128xf32> -> vector<8x128xf32>
    %c0_15 = arith.constant 0 : index
    %c0_16 = arith.constant 0 : index
    %17 = vector.load %arg7[%c0_15, %c0_16] : memref<1x128xf32, #tpu.memory_space<vmem>>, vector<1x128xf32>
    %18 = vector.broadcast %17 : vector<1x128xf32> to vector<8x128xf32>
    %19 = arith.addf %16, %18 : vector<8x128xf32>
    %c0_17 = arith.constant 0 : index
    %c0_18 = arith.constant 0 : index
    %20 = vector.load %arg8[%c0_17, %c0_18] : memref<8x128xf32, #tpu.memory_space<vmem>>, vector<8x128xf32>
    tpu.vector_store %arg8[%c0_17, %c0_18], %19 {strides = array<i32>} : memref<8x128xf32, #tpu.memory_space<vmem>>, vector<8x128xf32>,
    return
  }
  func.func @transform_0(%arg0: i32) -> (i32, i32) {
    %c0_i32 = arith.constant 0 : i32
    %c0_i32_0 = arith.constant 0 : i32
    return %arg0, %c0_i32 : i32, i32
  }
  func.func @transform_1(%arg0: i32) -> (i32, i32) {
    %c0_i32 = arith.constant 0 : i32
    %c0_i32_0 = arith.constant 0 : i32
    %c0_i32_1 = arith.constant 0 : i32
    return %c0_i32, %c0_i32_0 : i32, i32
  }
  func.func @transform_2(%arg0: i32) -> (i32, i32) {
    %c0_i32 = arith.constant 0 : i32
    %c0_i32_0 = arith.constant 0 : i32
    %c0_i32_1 = arith.constant 0 : i32
    return %c0_i32, %c0_i32_0 : i32, i32
  }
  func.func @transform_3(%arg0: i32) -> (i32, i32) {
    %c0_i32 = arith.constant 0 : i32
    %c0_i32_0 = arith.constant 0 : i32
    %c0_i32_1 = arith.constant 0 : i32
    return %c0_i32, %c0_i32_0 : i32, i32
  }
  func.func @transform_4(%arg0: i32) -> (i32, i32) {
    %c0_i32 = arith.constant 0 : i32
    %c0_i32_0 = arith.constant 0 : i32
    %c0_i32_1 = arith.constant 0 : i32
    return %c0_i32, %c0_i32_0 : i32, i32
  }
  func.func @transform_5(%arg0: i32) -> (i32, i32) {
    %c0_i32 = arith.constant 0 : i32
    %c0_i32_0 = arith.constant 0 : i32
    %c0_i32_1 = arith.constant 0 : i32
    return %c0_i32, %c0_i32_0 : i32, i32
  }
  func.func @transform_6(%arg0: i32) -> (i32, i32) {
    %c0_i32 = arith.constant 0 : i32
    %c0_i32_0 = arith.constant 0 : i32
    %c0_i32_1 = arith.constant 0 : i32
    return %c0_i32, %c0_i32_0 : i32, i32
  }
  func.func @transform_7(%arg0: i32) -> (i32, i32) {
    %c0_i32 = arith.constant 0 : i32
    %c0_i32_0 = arith.constant 0 : i32
    return %arg0, %c0_i32 : i32, i32
  }
}

module attributes {stable_mosaic.version = 11 : i64} {
  func.func @_mlp_kernel(%arg0: i32, %arg1: memref<8x128xf32, #tpu.memory_space<vmem>>, %arg2: memref<128x128xf32, #tpu.memory_space<vmem>>, %arg3: memref<128x128xf32, #tpu.memory_space<vmem>>, %arg4: memref<128x128xf32, #tpu.memory_space<vmem>>, %arg5: memref<1x128xf32, #tpu.memory_space<vmem>>, %arg6: memref<1x128xf32, #tpu.memory_space<vmem>>, %arg7: memref<1x128xf32, #tpu.memory_space<vmem>>, %arg8: memref<8x128xf32, #tpu.memory_space<vmem>>) attributes {dimension_semantics = [#tpu.dimension_semantics<parallel>], iteration_bounds = array<i64: 1>, scalar_prefetch = 0 : i64, scratch_operands = 0 : i64, tpu.core_type = #tpu.core_type<tc>, window_params = [{transform_indices = @transform_0, window_bounds = array<i64: 8, 128>}, {pipeline_mode = #tpu.pipeline_mode<synchronous>, transform_indices = @transform_1, window_bounds = array<i64: 128, 128>}, {pipeline_mode = #tpu.pipeline_mode<synchronous>, transform_indices = @transform_2, window_bounds = array<i64: 128, 128>}, {pipeline_mode = #tpu.pipeline_mode<synchronous>, transform_indices = @transform_3, window_bounds = array<i64: 128, 128>}, {pipeline_mode = #tpu.pipeline_mode<synchronous>, transform_indices = @transform_4, window_bounds = array<i64: 1, 128>}, {pipeline_mode = #tpu.pipeline_mode<synchronous>, transform_indices = @transform_5, window_bounds = array<i64: 1, 128>}, {pipeline_mode = #tpu.pipeline_mode<synchronous>, transform_indices = @transform_6, window_bounds = array<i64: 1, 128>}, {transform_indices = @transform_7, window_bounds = array<i64: 8, 128>}]} {
    %c0 = arith.constant 0 : index
    %c0_0 = arith.constant 0 : index
    %0 = vector.load %arg1[%c0, %c0_0] : memref<8x128xf32, #tpu.memory_space<vmem>>, vector<8x128xf32>
    %c0_1 = arith.constant 0 : index
    %c0_2 = arith.constant 0 : index
    %1 = vector.load %arg2[%c0_1, %c0_2] : memref<128x128xf32, #tpu.memory_space<vmem>>, vector<128x128xf32>
    %cst = arith.constant dense<0.000000e+00> : vector<8x128xf32>
    %2 = tpu.matmul %0, %1, %cst {dimension_numbers = #tpu.dot_dimension_numbers<[1], [0], [0], [1], [0, 0, 1, 1], [], []>} : vector<8x128xf32>, vector<128x128xf32>, vector<8x128xf32> -> vector<8x128xf32>
    %c0_3 = arith.constant 0 : index
    %c0_4 = arith.constant 0 : index
    %3 = vector.load %arg5[%c0_3, %c0_4] : memref<1x128xf32, #tpu.memory_space<vmem>>, vector<1x128xf32>
    %4 = vector.broadcast %3 : vector<1x128xf32> to vector<8x128xf32>
    %5 = arith.addf %2, %4 : vector<8x128xf32>
    %cst_5 = arith.constant 0.000000e+00 : f32
    %6 = vector.broadcast %cst_5 : f32 to vector<8x128xf32>
    %7 = arith.maximumf %5, %6 : vector<8x128xf32>
    %c0_6 = arith.constant 0 : index
    %c0_7 = arith.constant 0 : index
    %8 = vector.load %arg3[%c0_6, %c0_7] : memref<128x128xf32, #tpu.memory_space<vmem>>, vector<128x128xf32>
    %cst_8 = arith.constant dense<0.000000e+00> : vector<8x128xf32>
    %9 = tpu.matmul %7, %8, %cst_8 {dimension_numbers = #tpu.dot_dimension_numbers<[1], [0], [0], [1], [0, 0, 1, 1], [], []>} : vector<8x128xf32>, vector<128x128xf32>, vector<8x128xf32> -> vector<8x128xf32>
    %c0_9 = arith.constant 0 : index
    %c0_10 = arith.constant 0 : index
    %10 = vector.load %arg6[%c0_9, %c0_10] : memref<1x128xf32, #tpu.memory_space<vmem>>, vector<1x128xf32>
    %11 = vector.broadcast %10 : vector<1x128xf32> to vector<8x128xf32>
    %12 = arith.addf %9, %11 : vector<8x128xf32>
    %cst_11 = arith.constant 0.000000e+00 : f32
    %13 = vector.broadcast %cst_11 : f32 to vector<8x128xf32>
    %14 = arith.maximumf %12, %13 : vector<8x128xf32>
    %c0_12 = arith.constant 0 : index
    %c0_13 = arith.constant 0 : index
    %15 = vector.load %arg4[%c0_12, %c0_13] : memref<128x128xf32, #tpu.memory_space<vmem>>, vector<128x128xf32>
    %cst_14 = arith.constant dense<0.000000e+00> : vector<8x128xf32>
    %16 = tpu.matmul %14, %15, %cst_14 {dimension_numbers = #tpu.dot_dimension_numbers<[1], [0], [0], [1], [0, 0, 1, 1], [], []>} : vector<8x128xf32>, vector<128x128xf32>, vector<8x128xf32> -> vector<8x128xf32>
    %c0_15 = arith.constant 0 : index
    %c0_16 = arith.constant 0 : index
    %17 = vector.load %arg7[%c0_15, %c0_16] : memref<1x128xf32, #tpu.memory_space<vmem>>, vector<1x128xf32>
    %18 = vector.broadcast %17 : vector<1x128xf32> to vector<8x128xf32>
    %19 = arith.addf %16, %18 : vector<8x128xf32>
    %c0_17 = arith.constant 0 : index
    %c0_18 = arith.constant 0 : index
    %20 = vector.load %arg8[%c0_17, %c0_18] : memref<8x128xf32, #tpu.memory_space<vmem>>, vector<8x128xf32>
    tpu.vector_store %arg8[%c0_17, %c0_18], %19 {strides = array<i32>} : memref<8x128xf32, #tpu.memory_space<vmem>>, vector<8x128xf32>,
    return
  }
  func.func @transform_0(%arg0: i32) -> (i32, i32) {
    %c0_i32 = arith.constant 0 : i32
    %c0_i32_0 = arith.constant 0 : i32
    return %arg0, %c0_i32 : i32, i32
  }
  func.func @transform_1(%arg0: i32) -> (i32, i32) {
    %c0_i32 = arith.constant 0 : i32
    %c0_i32_0 = arith.constant 0 : i32
    %c0_i32_1 = arith.constant 0 : i32
    return %c0_i32, %c0_i32_0 : i32, i32
  }
  func.func @transform_2(%arg0: i32) -> (i32, i32) {
    %c0_i32 = arith.constant 0 : i32
    %c0_i32_0 = arith.constant 0 : i32
    %c0_i32_1 = arith.constant 0 : i32
    return %c0_i32, %c0_i32_0 : i32, i32
  }
  func.func @transform_3(%arg0: i32) -> (i32, i32) {
    %c0_i32 = arith.constant 0 : i32
    %c0_i32_0 = arith.constant 0 : i32
    %c0_i32_1 = arith.constant 0 : i32
    return %c0_i32, %c0_i32_0 : i32, i32
  }
  func.func @transform_4(%arg0: i32) -> (i32, i32) {
    %c0_i32 = arith.constant 0 : i32
    %c0_i32_0 = arith.constant 0 : i32
    %c0_i32_1 = arith.constant 0 : i32
    return %c0_i32, %c0_i32_0 : i32, i32
  }
  func.func @transform_5(%arg0: i32) -> (i32, i32) {
    %c0_i32 = arith.constant 0 : i32
    %c0_i32_0 = arith.constant 0 : i32
    %c0_i32_1 = arith.constant 0 : i32
    return %c0_i32, %c0_i32_0 : i32, i32
  }
  func.func @transform_6(%arg0: i32) -> (i32, i32) {
    %c0_i32 = arith.constant 0 : i32
    %c0_i32_0 = arith.constant 0 : i32
    %c0_i32_1 = arith.constant 0 : i32
    return %c0_i32, %c0_i32_0 : i32, i32
  }
  func.func @transform_7(%arg0: i32) -> (i32, i32) {
    %c0_i32 = arith.constant 0 : i32
    %c0_i32_0 = arith.constant 0 : i32
    return %arg0, %c0_i32 : i32, i32
  }
}

</mosaic_0001>

<llo_original>
// kernel: tpu_custom_call.1
$region0: #{tpu_custom_call.1}
  #allocation0 [shape = 'u32[]', space=smem, size = 0x4, offset = 0x4, fixed_abs, tag = 'smem constant byte address 0x4 - core index']
  #allocation1 [shape = 'u32[144,128]{1,0:T(1,128)}', space=vmem, size = 0x12000, scoped, tag = 'internal scratch']
  %s0 = inlined_call_operand.hbm [shape: f32[8,128], index: 0, kind: input, shape index: {}]
  %s1 = inlined_call_operand.hbm [shape: f32[128,128], index: 1, kind: input, shape index: {}]
  %s2 = inlined_call_operand.hbm [shape: f32[128,128], index: 2, kind: input, shape index: {}]
  %s3 = inlined_call_operand.hbm [shape: f32[128,128], index: 3, kind: input, shape index: {}]
  %s4 = inlined_call_operand.vmem [shape: f32[1,128], index: 4, kind: input, shape index: {}]
  %s5 = inlined_call_operand.vmem [shape: f32[1,128], index: 5, kind: input, shape index: {}]
  %s6 = inlined_call_operand.vmem [shape: f32[1,128], index: 6, kind: input, shape index: {}]
  %s7 = inlined_call_operand.hbm [shape: f32[8,128], index: 7, kind: output, shape index: {}]
  %s8 = sld [smem:[#allocation0]]
  $region54: #{tpu_custom_call.1} parent=0
    _
  %s10 = ssub.s32 1, %s8
  %s11 = scalar_select 0, %s10, %s8
  $region1: #{tpu_custom_call.1} parent=0
    #allocation2 [shape = 'u8[4096]{0}', space=vmem, size = 0x1000, scoped, tag = 'input window, operand 0, single buffered']
    #allocation3 [shape = 's32[1]{0}', space=sflag, size = 0x4, scoped, tag = 'scoped memory for tpu_custom_call.1']
    #allocation4 [shape = 's32[1]{0}', space=sflag, size = 0x4, scoped, tag = 'scoped memory for tpu_custom_call.1']
    #allocation5 [shape = 'u8[65536]{0}', space=vmem, size = 0x10000, scoped, tag = 'input window, operand 1, single buffered']
    #allocation6 [shape = 's32[1]{0}', space=sflag, size = 0x4, scoped, tag = 'scoped memory for tpu_custom_call.1']
    #allocation7 [shape = 'u8[65536]{0}', space=vmem, size = 0x10000, scoped, tag = 'input window, operand 2, single buffered']
    #allocation8 [shape = 'u8[65536]{0}', space=vmem, size = 0x10000, scoped, tag = 'input window, operand 3, single buffered']
    #allocation9 [shape = 's32[1]{0}', space=sflag, size = 0x4, scoped, tag = 'scoped memory for tpu_custom_call.1']
    #allocation10 [shape = 'u8[4096]{0}', space=vmem, size = 0x1000, scoped, tag = 'output window, operand 0, single buffered']
    %12 = vsyncpa [#allocation3], 0
    %13 = vsyncpa [#allocation6], 0
    %14 = vsyncpa [#allocation9], 0
    %15 = vsyncpa [#allocation4], 0
    // Predicated region
    $region2: #{tpu_custom_call.1} parent=1 // pred_check
      _
    $region3: #{tpu_custom_call.1} parent=1 // pred_check_branch
      %17 = sbr.rel (0) target = $region5
    $region4: #{tpu_custom_call.1} parent=1 // pred_region
      %s19 = ssub.s32 128, 128
      %20 = vsyncadd [#allocation3], %s19
      %s22 = sshll.u32 [#allocation2], 4
      %s23 = int_to_ptr.vmem [resolvable:$true] %s22
      %25 = dma.hbm_to_vmem [thread:$0]  %s0, 128, %s23, [#allocation3]
    $region5: #{tpu_custom_call.1} parent=1 // pred_fallthru
      _
    // Predicated region
    $region6: #{tpu_custom_call.1} parent=1 // pred_check
      _
    $region7: #{tpu_custom_call.1} parent=1 // pred_check_branch
      %27 = sbr.rel (0) target = $region9
    $region8: #{tpu_custom_call.1} parent=1 // pred_region
      %s29 = ssub.s32 2048, 2048
      %30 = vsyncadd [#allocation6], %s29
      %s31 = sshll.u32 [#allocation5], 4
      %s32 = int_to_ptr.vmem [resolvable:$true] %s31
      %37 = dma.hbm_to_vmem [thread:$0]  %s1, 2048, %s32, [#allocation6], 128, 128, 8
    $region9: #{tpu_custom_call.1} parent=1 // pred_fallthru
      _
    // Predicated region
    $region10: #{tpu_custom_call.1} parent=1 // pred_check
      _
    $region11: #{tpu_custom_call.1} parent=1 // pred_check_branch
      %39 = sbr.rel (0) target = $region13
    $region12: #{tpu_custom_call.1} parent=1 // pred_region
      %s41 = ssub.s32 2048, 2048
      %42 = vsyncadd [#allocation6], %s41
      %s43 = sshll.u32 [#allocation7], 4
      %s44 = int_to_ptr.vmem [resolvable:$true] %s43
      %49 = dma.hbm_to_vmem [thread:$0]  %s2, 2048, %s44, [#allocation6], 128, 128, 8
    $region13: #{tpu_custom_call.1} parent=1 // pred_fallthru
      _
    // Predicated region
    $region14: #{tpu_custom_call.1} parent=1 // pred_check
      _
    $region15: #{tpu_custom_call.1} parent=1 // pred_check_branch
      %51 = sbr.rel (0) target = $region17
    $region16: #{tpu_custom_call.1} parent=1 // pred_region
      %s53 = ssub.s32 2048, 2048
      %54 = vsyncadd [#allocation9], %s53
      %s55 = sshll.u32 [#allocation8], 4
      %s56 = int_to_ptr.vmem [resolvable:$true] %s55
      %61 = dma.hbm_to_vmem [thread:$0]  %s3, 2048, %s56, [#allocation9], 128, 128, 8
    $region17: #{tpu_custom_call.1} parent=1 // pred_fallthru
      _
    // Predicated region
    $region18: #{tpu_custom_call.1} parent=1 // pred_check
      _
    $region19: #{tpu_custom_call.1} parent=1 // pred_check_branch
      %63 = sbr.rel (0) target = $region21
    $region20: #{tpu_custom_call.1} parent=1 // pred_region
      _
    $region21: #{tpu_custom_call.1} parent=1 // pred_fallthru
      _
    // Predicated region
    $region22: #{tpu_custom_call.1} parent=1 // pred_check
      _
    $region23: #{tpu_custom_call.1} parent=1 // pred_check_branch
      %65 = sbr.rel (0) target = $region25
    $region24: #{tpu_custom_call.1} parent=1 // pred_region
      _
    $region25: #{tpu_custom_call.1} parent=1 // pred_fallthru
      _
    // Predicated region
    $region26: #{tpu_custom_call.1} parent=1 // pred_check
      _
    $region27: #{tpu_custom_call.1} parent=1 // pred_check_branch
      %67 = sbr.rel (0) target = $region29
    $region28: #{tpu_custom_call.1} parent=1 // pred_region
      _
    $region29: #{tpu_custom_call.1} parent=1 // pred_fallthru
      _
    // Predicated region
    $region30: #{tpu_custom_call.1} parent=1 // pred_check
      _
    $region31: #{tpu_custom_call.1} parent=1 // pred_check_branch
      %69 = sbr.rel (0) target = $region33
    $region32: #{tpu_custom_call.1} parent=1 // pred_region
      %70 = dma.done [#allocation3], 128
    $region33: #{tpu_custom_call.1} parent=1 // pred_fallthru
      _
    // Predicated region
    $region34: #{tpu_custom_call.1} parent=1 // pred_check
      _
    $region35: #{tpu_custom_call.1} parent=1 // pred_check_branch
      %72 = sbr.rel (0) target = $region37
    $region36: #{tpu_custom_call.1} parent=1 // pred_region
      %73 = dma.done [#allocation6], 2048
    $region37: #{tpu_custom_call.1} parent=1 // pred_fallthru
      _
    // Predicated region
    $region38: #{tpu_custom_call.1} parent=1 // pred_check
      _
    $region39: #{tpu_custom_call.1} parent=1 // pred_check_branch
      %75 = sbr.rel (0) target = $region41
    $region40: #{tpu_custom_call.1} parent=1 // pred_region
      %76 = dma.done [#allocation6], 2048
    $region41: #{tpu_custom_call.1} parent=1 // pred_fallthru
      _
    // Predicated region
    $region42: #{tpu_custom_call.1} parent=1 // pred_check
      _
    $region43: #{tpu_custom_call.1} parent=1 // pred_check_branch
      %78 = sbr.rel (0) target = $region45
    $region44: #{tpu_custom_call.1} parent=1 // pred_region
      %79 = dma.done [#allocation9], 2048
    $region45: #{tpu_custom_call.1} parent=1 // pred_fallthru
      _
    %v80 = vld [vmem:[#allocation2] sm:$0xff]
    %v81 = vld [vmem:[#allocation5] sm:$0xff]
    %v82 = vld [vmem:[#allocation5 + $0x8] sm:$0xff]
    %v83 = vld [vmem:[#allocation5 + $0x10] sm:$0xff]
    %v84 = vld [vmem:[#allocation5 + $0x18] sm:$0xff]
    %v85 = vld [vmem:[#allocation5 + $0x20] sm:$0xff]
    %v86 = vld [vmem:[#allocation5 + $0x28] sm:$0xff]
    %v87 = vld [vmem:[#allocation5 + $0x30] sm:$0xff]
    %v88 = vld [vmem:[#allocation5 + $0x38] sm:$0xff]
    %v89 = vld [vmem:[#allocation5 + $0x40] sm:$0xff]
    %v90 = vld [vmem:[#allocation5 + $0x48] sm:$0xff]
    %v91 = vld [vmem:[#allocation5 + $0x50] sm:$0xff]
    %v92 = vld [vmem:[#allocation5 + $0x58] sm:$0xff]
    %v93 = vld [vmem:[#allocation5 + $0x60] sm:$0xff]
    %v94 = vld [vmem:[#allocation5 + $0x68] sm:$0xff]
    %v95 = vld [vmem:[#allocation5 + $0x70] sm:$0xff]
    %v96 = vld [vmem:[#allocation5 + $0x78] sm:$0xff]
    %v97 = vld [vmem:[%s4] sm:$0x1]
    %v99 = vlaneseq
    %v100 = vshrl.u32 %v99, 7
    %v101 = vsub.s32 0, %v100
    %v102 = vrot.slane %v97, %v101
    %104 = vmatprep.subr.mxu0 0.0
    %105 = vmatpush1.msra.mxu0 %v81
    %106 = vmatprep.subr.mxu0 0.0
    %107 = vmatpush1.msra.mxu0 %v82
    %108 = vmatprep.subr.mxu0 0.0
    %109 = vmatpush1.msra.mxu0 %v83
    %110 = vmatprep.subr.mxu0 0.0
    %111 = vmatpush1.msra.mxu0 %v84
    %112 = vmatprep.subr.mxu0 0.0
    %113 = vmatpush1.msra.mxu0 %v85
    %114 = vmatprep.subr.mxu0 0.0
    %115 = vmatpush1.msra.mxu0 %v86
    %116 = vmatprep.subr.mxu0 0.0
    %117 = vmatpush1.msra.mxu0 %v87
    %118 = vmatprep.subr.mxu0 0.0
    %119 = vmatpush1.msra.mxu0 %v88
    %120 = vmatprep.subr.mxu0 0.0
    %121 = vmatpush1.msra.mxu0 %v89
    %122 = vmatprep.subr.mxu0 0.0
    %123 = vmatpush1.msra.mxu0 %v90
    %124 = vmatprep.subr.mxu0 0.0
    %125 = vmatpush1.msra.mxu0 %v91
    %126 = vmatprep.subr.mxu0 0.0
    %127 = vmatpush1.msra.mxu0 %v92
    %128 = vmatprep.subr.mxu0 0.0
    %129 = vmatpush1.msra.mxu0 %v93
    %130 = vmatprep.subr.mxu0 0.0
    %131 = vmatpush1.msra.mxu0 %v94
    %132 = vmatprep.subr.mxu0 0.0
    %133 = vmatpush1.msra.mxu0 %v95
    %134 = vmatprep.subr.mxu0 0.0
    %135 = vmatpush1.msra.mxu0 %v96
    %136 = vmatprep.subr.mxu0 0.0
    %137 = vmatpush1.msra.mxu0 0.0
    %138 = vmatprep.subr.mxu0 0.0
    %139 = vmatpush1.msra.mxu0 0.0
    %140 = vmatprep.subr.mxu0 0.0
    %141 = vmatpush1.msra.mxu0 0.0
    %142 = vmatprep.subr.mxu0 0.0
    %143 = vmatpush1.msra.mxu0 0.0
    %144 = vmatprep.subr.mxu0 0.0
    %145 = vmatpush1.msra.mxu0 0.0
    %146 = vmatprep.subr.mxu0 0.0
    %147 = vmatpush1.msra.mxu0 0.0
    %148 = vmatprep.subr.mxu0 0.0
    %149 = vmatpush1.msra.mxu0 0.0
    %150 = vmatprep.subr.mxu0 0.0
    %151 = vmatpush1.msra.mxu0 0.0
    %152 = vmatprep.subr.mxu0 0.0
    %153 = vmatpush1.msra.mxu0 0.0
    %154 = vmatprep.subr.mxu0 0.0
    %155 = vmatpush1.msra.mxu0 0.0
    %156 = vmatprep.subr.mxu0 0.0
    %157 = vmatpush1.msra.mxu0 0.0
    %158 = vmatprep.subr.mxu0 0.0
    %159 = vmatpush1.msra.mxu0 0.0
    %160 = vmatprep.subr.mxu0 0.0
    %161 = vmatpush1.msra.mxu0 0.0
    %162 = vmatprep.subr.mxu0 0.0
    %163 = vmatpush1.msra.mxu0 0.0
    %164 = vmatprep.subr.mxu0 0.0
    %165 = vmatpush1.msra.mxu0 0.0
    %166 = vmatprep.subr.mxu0 0.0
    %167 = vmatpush1.msra.mxu0 0.0
    %168 = vmatprep.mubr.f32.mxu0 0.0
    %169 = vmatmul.mubr.f32.gmra.mrb[0].mxu0 %v80
    %v170 = vpop.f32.mrb[0].mxu0
    %v171 = vadd.f32 %v102, %v170
    %v172 = vpop.f32.mrb[0].mxu0
    %173 = vdwg.mxu0
    %v174 = vmax.f32 %v171, 0.0
    %v175 = vld [vmem:[#allocation7] sm:$0xff]
    %v176 = vld [vmem:[#allocation7 + $0x8] sm:$0xff]
    %v177 = vld [vmem:[#allocation7 + $0x10] sm:$0xff]
    %v178 = vld [vmem:[#allocation7 + $0x18] sm:$0xff]
    %v179 = vld [vmem:[#allocation7 + $0x20] sm:$0xff]
    %v180 = vld [vmem:[#allocation7 + $0x28] sm:$0xff]
    %v181 = vld [vmem:[#allocation7 + $0x30] sm:$0xff]
    %v182 = vld [vmem:[#allocation7 + $0x38] sm:$0xff]
    %v183 = vld [vmem:[#allocation7 + $0x40] sm:$0xff]
    %v184 = vld [vmem:[#allocation7 + $0x48] sm:$0xff]
    %v185 = vld [vmem:[#allocation7 + $0x50] sm:$0xff]
    %v186 = vld [vmem:[#allocation7 + $0x58] sm:$0xff]
    %v187 = vld [vmem:[#allocation7 + $0x60] sm:$0xff]
    %v188 = vld [vmem:[#allocation7 + $0x68] sm:$0xff]
    %v189 = vld [vmem:[#allocation7 + $0x70] sm:$0xff]
    %v190 = vld [vmem:[#allocation7 + $0x78] sm:$0xff]
    %v191 = vld [vmem:[%s5] sm:$0x1]
    %v193 = vlaneseq
    %v194 = vshrl.u32 %v193, 7
    %v195 = vsub.s32 0, %v194
    %v196 = vrot.slane %v191, %v195
    %198 = vmatprep.subr.mxu0 0.0
    %199 = vmatpush1.msra.mxu0 %v175
    %200 = vmatprep.subr.mxu0 0.0
    %201 = vmatpush1.msra.mxu0 %v176
    %202 = vmatprep.subr.mxu0 0.0
    %203 = vmatpush1.msra.mxu0 %v177
    %204 = vmatprep.subr.mxu0 0.0
    %205 = vmatpush1.msra.mxu0 %v178
    %206 = vmatprep.subr.mxu0 0.0
    %207 = vmatpush1.msra.mxu0 %v179
    %208 = vmatprep.subr.mxu0 0.0
    %209 = vmatpush1.msra.mxu0 %v180
    %210 = vmatprep.subr.mxu0 0.0
    %211 = vmatpush1.msra.mxu0 %v181
    %212 = vmatprep.subr.mxu0 0.0
    %213 = vmatpush1.msra.mxu0 %v182
    %214 = vmatprep.subr.mxu0 0.0
    %215 = vmatpush1.msra.mxu0 %v183
    %216 = vmatprep.subr.mxu0 0.0
    %217 = vmatpush1.msra.mxu0 %v184
    %218 = vmatprep.subr.mxu0 0.0
    %219 = vmatpush1.msra.mxu0 %v185
    %220 = vmatprep.subr.mxu0 0.0
    %221 = vmatpush1.msra.mxu0 %v186
    %222 = vmatprep.subr.mxu0 0.0
    %223 = vmatpush1.msra.mxu0 %v187
    %224 = vmatprep.subr.mxu0 0.0
    %225 = vmatpush1.msra.mxu0 %v188
    %226 = vmatprep.subr.mxu0 0.0
    %227 = vmatpush1.msra.mxu0 %v189
    %228 = vmatprep.subr.mxu0 0.0
    %229 = vmatpush1.msra.mxu0 %v190
    %230 = vmatprep.subr.mxu0 0.0
    %231 = vmatpush1.msra.mxu0 0.0
    %232 = vmatprep.subr.mxu0 0.0
    %233 = vmatpush1.msra.mxu0 0.0
    %234 = vmatprep.subr.mxu0 0.0
    %235 = vmatpush1.msra.mxu0 0.0
    %236 = vmatprep.subr.mxu0 0.0
    %237 = vmatpush1.msra.mxu0 0.0
    %238 = vmatprep.subr.mxu0 0.0
    %239 = vmatpush1.msra.mxu0 0.0
    %240 = vmatprep.subr.mxu0 0.0
    %241 = vmatpush1.msra.mxu0 0.0
    %242 = vmatprep.subr.mxu0 0.0
    %243 = vmatpush1.msra.mxu0 0.0
    %244 = vmatprep.subr.mxu0 0.0
    %245 = vmatpush1.msra.mxu0 0.0
    %246 = vmatprep.subr.mxu0 0.0
    %247 = vmatpush1.msra.mxu0 0.0
    %248 = vmatprep.subr.mxu0 0.0
    %249 = vmatpush1.msra.mxu0 0.0
    %250 = vmatprep.subr.mxu0 0.0
    %251 = vmatpush1.msra.mxu0 0.0
    %252 = vmatprep.subr.mxu0 0.0
    %253 = vmatpush1.msra.mxu0 0.0
    %254 = vmatprep.subr.mxu0 0.0
    %255 = vmatpush1.msra.mxu0 0.0
    %256 = vmatprep.subr.mxu0 0.0
    %257 = vmatpush1.msra.mxu0 0.0
    %258 = vmatprep.subr.mxu0 0.0
    %259 = vmatpush1.msra.mxu0 0.0
    %260 = vmatprep.subr.mxu0 0.0
    %261 = vmatpush1.msra.mxu0 0.0
    %262 = vmatprep.mubr.f32.mxu0 0.0
    %263 = vmatmul.mubr.f32.gmra.mrb[0].mxu0 %v174
    %v264 = vpop.f32.mrb[0].mxu0
    %v265 = vadd.f32 %v196, %v264
    %v266 = vpop.f32.mrb[0].mxu0
    %267 = vdwg.mxu0
    %v268 = vmax.f32 %v265, 0.0
    %v269 = vld [vmem:[#allocation8] sm:$0xff]
    %v270 = vld [vmem:[#allocation8 + $0x8] sm:$0xff]
    %v271 = vld [vmem:[#allocation8 + $0x10] sm:$0xff]
    %v272 = vld [vmem:[#allocation8 + $0x18] sm:$0xff]
    %v273 = vld [vmem:[#allocation8 + $0x20] sm:$0xff]
    %v274 = vld [vmem:[#allocation8 + $0x28] sm:$0xff]
    %v275 = vld [vmem:[#allocation8 + $0x30] sm:$0xff]
    %v276 = vld [vmem:[#allocation8 + $0x38] sm:$0xff]
    %v277 = vld [vmem:[#allocation8 + $0x40] sm:$0xff]
    %v278 = vld [vmem:[#allocation8 + $0x48] sm:$0xff]
    %v279 = vld [vmem:[#allocation8 + $0x50] sm:$0xff]
    %v280 = vld [vmem:[#allocation8 + $0x58] sm:$0xff]
    %v281 = vld [vmem:[#allocation8 + $0x60] sm:$0xff]
    %v282 = vld [vmem:[#allocation8 + $0x68] sm:$0xff]
    %v283 = vld [vmem:[#allocation8 + $0x70] sm:$0xff]
    %v284 = vld [vmem:[#allocation8 + $0x78] sm:$0xff]
    %v285 = vld [vmem:[%s6] sm:$0x1]
    %v287 = vlaneseq
    %v288 = vshrl.u32 %v287, 7
    %v289 = vsub.s32 0, %v288
    %v290 = vrot.slane %v285, %v289
    %292 = vmatprep.subr.mxu0 0.0
    %293 = vmatpush1.msra.mxu0 %v269
    %294 = vmatprep.subr.mxu0 0.0
    %295 = vmatpush1.msra.mxu0 %v270
    %296 = vmatprep.subr.mxu0 0.0
    %297 = vmatpush1.msra.mxu0 %v271
    %298 = vmatprep.subr.mxu0 0.0
    %299 = vmatpush1.msra.mxu0 %v272
    %300 = vmatprep.subr.mxu0 0.0
    %301 = vmatpush1.msra.mxu0 %v273
    %302 = vmatprep.subr.mxu0 0.0
    %303 = vmatpush1.msra.mxu0 %v274
    %304 = vmatprep.subr.mxu0 0.0
    %305 = vmatpush1.msra.mxu0 %v275
    %306 = vmatprep.subr.mxu0 0.0
    %307 = vmatpush1.msra.mxu0 %v276
    %308 = vmatprep.subr.mxu0 0.0
    %309 = vmatpush1.msra.mxu0 %v277
    %310 = vmatprep.subr.mxu0 0.0
    %311 = vmatpush1.msra.mxu0 %v278
    %312 = vmatprep.subr.mxu0 0.0
    %313 = vmatpush1.msra.mxu0 %v279
    %314 = vmatprep.subr.mxu0 0.0
    %315 = vmatpush1.msra.mxu0 %v280
    %316 = vmatprep.subr.mxu0 0.0
    %317 = vmatpush1.msra.mxu0 %v281
    %318 = vmatprep.subr.mxu0 0.0
    %319 = vmatpush1.msra.mxu0 %v282
    %320 = vmatprep.subr.mxu0 0.0
    %321 = vmatpush1.msra.mxu0 %v283
    %322 = vmatprep.subr.mxu0 0.0
    %323 = vmatpush1.msra.mxu0 %v284
    %324 = vmatprep.subr.mxu0 0.0
    %325 = vmatpush1.msra.mxu0 0.0
    %326 = vmatprep.subr.mxu0 0.0
    %327 = vmatpush1.msra.mxu0 0.0
    %328 = vmatprep.subr.mxu0 0.0
    %329 = vmatpush1.msra.mxu0 0.0
    %330 = vmatprep.subr.mxu0 0.0
    %331 = vmatpush1.msra.mxu0 0.0
    %332 = vmatprep.subr.mxu0 0.0
    %333 = vmatpush1.msra.mxu0 0.0
    %334 = vmatprep.subr.mxu0 0.0
    %335 = vmatpush1.msra.mxu0 0.0
    %336 = vmatprep.subr.mxu0 0.0
    %337 = vmatpush1.msra.mxu0 0.0
    %338 = vmatprep.subr.mxu0 0.0
    %339 = vmatpush1.msra.mxu0 0.0
    %340 = vmatprep.subr.mxu0 0.0
    %341 = vmatpush1.msra.mxu0 0.0
    %342 = vmatprep.subr.mxu0 0.0
    %343 = vmatpush1.msra.mxu0 0.0
    %344 = vmatprep.subr.mxu0 0.0
    %345 = vmatpush1.msra.mxu0 0.0
    %346 = vmatprep.subr.mxu0 0.0
    %347 = vmatpush1.msra.mxu0 0.0
    %348 = vmatprep.subr.mxu0 0.0
    %349 = vmatpush1.msra.mxu0 0.0
    %350 = vmatprep.subr.mxu0 0.0
    %351 = vmatpush1.msra.mxu0 0.0
    %352 = vmatprep.subr.mxu0 0.0
    %353 = vmatpush1.msra.mxu0 0.0
    %354 = vmatprep.subr.mxu0 0.0
    %355 = vmatpush1.msra.mxu0 0.0
    %356 = vmatprep.mubr.f32.mxu0 0.0
    %357 = vmatmul.mubr.f32.gmra.mrb[0].mxu0 %v268
    %v358 = vpop.f32.mrb[0].mxu0
    %v359 = vadd.f32 %v290, %v358
    %v360 = vpop.f32.mrb[0].mxu0
    %361 = vdwg.mxu0
    %362 = vst [vmem:[#allocation10] sm:$0xff] %v359
    // Predicated region
    $region46: #{tpu_custom_call.1} parent=1 // pred_check
      _
    $region47: #{tpu_custom_call.1} parent=1 // pred_check_branch
      %364 = sbr.rel (0) target = $region49
    $region48: #{tpu_custom_call.1} parent=1 // pred_region
      %s366 = ssub.s32 128, 128
      %367 = vsyncadd [#allocation4], %s366
      %s369 = sshll.u32 [#allocation10], 4
      %s370 = int_to_ptr.vmem [resolvable:$true] %s369
      %372 = dma.vmem_to_hbm [thread:$0]  %s370, 128, %s7, [#allocation4]
    $region49: #{tpu_custom_call.1} parent=1 // pred_fallthru
      _
    // Predicated region
    $region50: #{tpu_custom_call.1} parent=1 // pred_check
      _
    $region51: #{tpu_custom_call.1} parent=1 // pred_check_branch
      %374 = sbr.rel (0) target = $region53
    $region52: #{tpu_custom_call.1} parent=1 // pred_region
      %375 = dma.done [#allocation4], 128
    $region53: #{tpu_custom_call.1} parent=1 // pred_fallthru
      _
    %376 = vsyncpa [#allocation3], 1
    %377 = vsyncpa [#allocation6], 1
    %378 = vsyncpa [#allocation9], 1
    %379 = vsyncpa [#allocation4], 1

// kernel: tpu_custom_call.1
$region0: #{tpu_custom_call.1}
  #allocation0 [shape = 'u32[]', space=smem, size = 0x4, offset = 0x4, fixed_abs, tag = 'smem constant byte address 0x4 - core index']
  #allocation1 [shape = 'u32[144,128]{1,0:T(1,128)}', space=vmem, size = 0x12000, scoped, tag = 'internal scratch']
  %s0 = inlined_call_operand.hbm [shape: f32[8,128], index: 0, kind: input, shape index: {}]
  %s1 = inlined_call_operand.hbm [shape: f32[128,128], index: 1, kind: input, shape index: {}]
  %s2 = inlined_call_operand.hbm [shape: f32[128,128], index: 2, kind: input, shape index: {}]
  %s3 = inlined_call_operand.hbm [shape: f32[128,128], index: 3, kind: input, shape index: {}]
  %s4 = inlined_call_operand.vmem [shape: f32[1,128], index: 4, kind: input, shape index: {}]
  %s5 = inlined_call_operand.vmem [shape: f32[1,128], index: 5, kind: input, shape index: {}]
  %s6 = inlined_call_operand.vmem [shape: f32[1,128], index: 6, kind: input, shape index: {}]
  %s7 = inlined_call_operand.hbm [shape: f32[8,128], index: 7, kind: output, shape index: {}]
  %s8 = sld [smem:[#allocation0]]
  $region54: #{tpu_custom_call.1} parent=0
    _
  %s10 = ssub.s32 1, %s8
  %s11 = scalar_select 0, %s10, %s8
  $region1: #{tpu_custom_call.1} parent=0
    #allocation2 [shape = 'u8[4096]{0}', space=vmem, size = 0x1000, scoped, tag = 'input window, operand 0, single buffered']
    #allocation3 [shape = 's32[1]{0}', space=sflag, size = 0x4, scoped, tag = 'scoped memory for tpu_custom_call.1']
    #allocation4 [shape = 's32[1]{0}', space=sflag, size = 0x4, scoped, tag = 'scoped memory for tpu_custom_call.1']
    #allocation5 [shape = 'u8[65536]{0}', space=vmem, size = 0x10000, scoped, tag = 'input window, operand 1, single buffered']
    #allocation6 [shape = 's32[1]{0}', space=sflag, size = 0x4, scoped, tag = 'scoped memory for tpu_custom_call.1']
    #allocation7 [shape = 'u8[65536]{0}', space=vmem, size = 0x10000, scoped, tag = 'input window, operand 2, single buffered']
    #allocation8 [shape = 'u8[65536]{0}', space=vmem, size = 0x10000, scoped, tag = 'input window, operand 3, single buffered']
    #allocation9 [shape = 's32[1]{0}', space=sflag, size = 0x4, scoped, tag = 'scoped memory for tpu_custom_call.1']
    #allocation10 [shape = 'u8[4096]{0}', space=vmem, size = 0x1000, scoped, tag = 'output window, operand 0, single buffered']
    %12 = vsyncpa [#allocation3], 0
    %13 = vsyncpa [#allocation6], 0
    %14 = vsyncpa [#allocation9], 0
    %15 = vsyncpa [#allocation4], 0
    // Predicated region
    $region2: #{tpu_custom_call.1} parent=1 // pred_check
      _
    $region3: #{tpu_custom_call.1} parent=1 // pred_check_branch
      %17 = sbr.rel (0) target = $region5
    $region4: #{tpu_custom_call.1} parent=1 // pred_region
      %s19 = ssub.s32 128, 128
      %20 = vsyncadd [#allocation3], %s19
      %s22 = sshll.u32 [#allocation2], 4
      %s23 = int_to_ptr.vmem [resolvable:$true] %s22
      %25 = dma.hbm_to_vmem [thread:$0]  %s0, 128, %s23, [#allocation3]
    $region5: #{tpu_custom_call.1} parent=1 // pred_fallthru
      _
    // Predicated region
    $region6: #{tpu_custom_call.1} parent=1 // pred_check
      _
    $region7: #{tpu_custom_call.1} parent=1 // pred_check_branch
      %27 = sbr.rel (0) target = $region9
    $region8: #{tpu_custom_call.1} parent=1 // pred_region
      %s29 = ssub.s32 2048, 2048
      %30 = vsyncadd [#allocation6], %s29
      %s31 = sshll.u32 [#allocation5], 4
      %s32 = int_to_ptr.vmem [resolvable:$true] %s31
      %37 = dma.hbm_to_vmem [thread:$0]  %s1, 2048, %s32, [#allocation6], 128, 128, 8
    $region9: #{tpu_custom_call.1} parent=1 // pred_fallthru
      _
    // Predicated region
    $region10: #{tpu_custom_call.1} parent=1 // pred_check
      _
    $region11: #{tpu_custom_call.1} parent=1 // pred_check_branch
      %39 = sbr.rel (0) target = $region13
    $region12: #{tpu_custom_call.1} parent=1 // pred_region
      %s41 = ssub.s32 2048, 2048
      %42 = vsyncadd [#allocation6], %s41
      %s43 = sshll.u32 [#allocation7], 4
      %s44 = int_to_ptr.vmem [resolvable:$true] %s43
      %49 = dma.hbm_to_vmem [thread:$0]  %s2, 2048, %s44, [#allocation6], 128, 128, 8
    $region13: #{tpu_custom_call.1} parent=1 // pred_fallthru
      _
    // Predicated region
    $region14: #{tpu_custom_call.1} parent=1 // pred_check
      _
    $region15: #{tpu_custom_call.1} parent=1 // pred_check_branch
      %51 = sbr.rel (0) target = $region17
    $region16: #{tpu_custom_call.1} parent=1 // pred_region
      %s53 = ssub.s32 2048, 2048
      %54 = vsyncadd [#allocation9], %s53
      %s55 = sshll.u32 [#allocation8], 4
      %s56 = int_to_ptr.vmem [resolvable:$true] %s55
      %61 = dma.hbm_to_vmem [thread:$0]  %s3, 2048, %s56, [#allocation9], 128, 128, 8
    $region17: #{tpu_custom_call.1} parent=1 // pred_fallthru
      _
    // Predicated region
    $region18: #{tpu_custom_call.1} parent=1 // pred_check
      _
    $region19: #{tpu_custom_call.1} parent=1 // pred_check_branch
      %63 = sbr.rel (0) target = $region21
    $region20: #{tpu_custom_call.1} parent=1 // pred_region
      _
    $region21: #{tpu_custom_call.1} parent=1 // pred_fallthru
      _
    // Predicated region
    $region22: #{tpu_custom_call.1} parent=1 // pred_check
      _
    $region23: #{tpu_custom_call.1} parent=1 // pred_check_branch
      %65 = sbr.rel (0) target = $region25
    $region24: #{tpu_custom_call.1} parent=1 // pred_region
      _
    $region25: #{tpu_custom_call.1} parent=1 // pred_fallthru
      _
    // Predicated region
    $region26: #{tpu_custom_call.1} parent=1 // pred_check
      _
    $region27: #{tpu_custom_call.1} parent=1 // pred_check_branch
      %67 = sbr.rel (0) target = $region29
    $region28: #{tpu_custom_call.1} parent=1 // pred_region
      _
    $region29: #{tpu_custom_call.1} parent=1 // pred_fallthru
      _
    // Predicated region
    $region30: #{tpu_custom_call.1} parent=1 // pred_check
      _
    $region31: #{tpu_custom_call.1} parent=1 // pred_check_branch
      %69 = sbr.rel (0) target = $region33
    $region32: #{tpu_custom_call.1} parent=1 // pred_region
      %70 = dma.done [#allocation3], 128
    $region33: #{tpu_custom_call.1} parent=1 // pred_fallthru
      _
    // Predicated region
    $region34: #{tpu_custom_call.1} parent=1 // pred_check
      _
    $region35: #{tpu_custom_call.1} parent=1 // pred_check_branch
      %72 = sbr.rel (0) target = $region37
    $region36: #{tpu_custom_call.1} parent=1 // pred_region
      %73 = dma.done [#allocation6], 2048
    $region37: #{tpu_custom_call.1} parent=1 // pred_fallthru
      _
    // Predicated region
    $region38: #{tpu_custom_call.1} parent=1 // pred_check
      _
    $region39: #{tpu_custom_call.1} parent=1 // pred_check_branch
      %75 = sbr.rel (0) target = $region41
    $region40: #{tpu_custom_call.1} parent=1 // pred_region
      %76 = dma.done [#allocation6], 2048
    $region41: #{tpu_custom_call.1} parent=1 // pred_fallthru
      _
    // Predicated region
    $region42: #{tpu_custom_call.1} parent=1 // pred_check
      _
    $region43: #{tpu_custom_call.1} parent=1 // pred_check_branch
      %78 = sbr.rel (0) target = $region45
    $region44: #{tpu_custom_call.1} parent=1 // pred_region
      %79 = dma.done [#allocation9], 2048
    $region45: #{tpu_custom_call.1} parent=1 // pred_fallthru
      _
    %v80 = vld [vmem:[#allocation2] sm:$0xff]
    %v81 = vld [vmem:[#allocation5] sm:$0xff]
    %v82 = vld [vmem:[#allocation5 + $0x8] sm:$0xff]
    %v83 = vld [vmem:[#allocation5 + $0x10] sm:$0xff]
    %v84 = vld [vmem:[#allocation5 + $0x18] sm:$0xff]
    %v85 = vld [vmem:[#allocation5 + $0x20] sm:$0xff]
    %v86 = vld [vmem:[#allocation5 + $0x28] sm:$0xff]
    %v87 = vld [vmem:[#allocation5 + $0x30] sm:$0xff]
    %v88 = vld [vmem:[#allocation5 + $0x38] sm:$0xff]
    %v89 = vld [vmem:[#allocation5 + $0x40] sm:$0xff]
    %v90 = vld [vmem:[#allocation5 + $0x48] sm:$0xff]
    %v91 = vld [vmem:[#allocation5 + $0x50] sm:$0xff]
    %v92 = vld [vmem:[#allocation5 + $0x58] sm:$0xff]
    %v93 = vld [vmem:[#allocation5 + $0x60] sm:$0xff]
    %v94 = vld [vmem:[#allocation5 + $0x68] sm:$0xff]
    %v95 = vld [vmem:[#allocation5 + $0x70] sm:$0xff]
    %v96 = vld [vmem:[#allocation5 + $0x78] sm:$0xff]
    %v97 = vld [vmem:[%s4] sm:$0x1]
    %v99 = vlaneseq
    %v100 = vshrl.u32 %v99, 7
    %v101 = vsub.s32 0, %v100
    %v102 = vrot.slane %v97, %v101
    %104 = vmatprep.subr.mxu0 0.0
    %105 = vmatpush1.msra.mxu0 %v81
    %106 = vmatprep.subr.mxu0 0.0
    %107 = vmatpush1.msra.mxu0 %v82
    %108 = vmatprep.subr.mxu0 0.0
    %109 = vmatpush1.msra.mxu0 %v83
    %110 = vmatprep.subr.mxu0 0.0
    %111 = vmatpush1.msra.mxu0 %v84
    %112 = vmatprep.subr.mxu0 0.0
    %113 = vmatpush1.msra.mxu0 %v85
    %114 = vmatprep.subr.mxu0 0.0
    %115 = vmatpush1.msra.mxu0 %v86
    %116 = vmatprep.subr.mxu0 0.0
    %117 = vmatpush1.msra.mxu0 %v87
    %118 = vmatprep.subr.mxu0 0.0
    %119 = vmatpush1.msra.mxu0 %v88
    %120 = vmatprep.subr.mxu0 0.0
    %121 = vmatpush1.msra.mxu0 %v89
    %122 = vmatprep.subr.mxu0 0.0
    %123 = vmatpush1.msra.mxu0 %v90
    %124 = vmatprep.subr.mxu0 0.0
    %125 = vmatpush1.msra.mxu0 %v91
    %126 = vmatprep.subr.mxu0 0.0
    %127 = vmatpush1.msra.mxu0 %v92
    %128 = vmatprep.subr.mxu0 0.0
    %129 = vmatpush1.msra.mxu0 %v93
    %130 = vmatprep.subr.mxu0 0.0
    %131 = vmatpush1.msra.mxu0 %v94
    %132 = vmatprep.subr.mxu0 0.0
    %133 = vmatpush1.msra.mxu0 %v95
    %134 = vmatprep.subr.mxu0 0.0
    %135 = vmatpush1.msra.mxu0 %v96
    %136 = vmatprep.subr.mxu0 0.0
    %137 = vmatpush1.msra.mxu0 0.0
    %138 = vmatprep.subr.mxu0 0.0
    %139 = vmatpush1.msra.mxu0 0.0
    %140 = vmatprep.subr.mxu0 0.0
    %141 = vmatpush1.msra.mxu0 0.0
    %142 = vmatprep.subr.mxu0 0.0
    %143 = vmatpush1.msra.mxu0 0.0
    %144 = vmatprep.subr.mxu0 0.0
    %145 = vmatpush1.msra.mxu0 0.0
    %146 = vmatprep.subr.mxu0 0.0
    %147 = vmatpush1.msra.mxu0 0.0
    %148 = vmatprep.subr.mxu0 0.0
    %149 = vmatpush1.msra.mxu0 0.0
    %150 = vmatprep.subr.mxu0 0.0
    %151 = vmatpush1.msra.mxu0 0.0
    %152 = vmatprep.subr.mxu0 0.0
    %153 = vmatpush1.msra.mxu0 0.0
    %154 = vmatprep.subr.mxu0 0.0
    %155 = vmatpush1.msra.mxu0 0.0
    %156 = vmatprep.subr.mxu0 0.0
    %157 = vmatpush1.msra.mxu0 0.0
    %158 = vmatprep.subr.mxu0 0.0
    %159 = vmatpush1.msra.mxu0 0.0
    %160 = vmatprep.subr.mxu0 0.0
    %161 = vmatpush1.msra.mxu0 0.0
    %162 = vmatprep.subr.mxu0 0.0
    %163 = vmatpush1.msra.mxu0 0.0
    %164 = vmatprep.subr.mxu0 0.0
    %165 = vmatpush1.msra.mxu0 0.0
    %166 = vmatprep.subr.mxu0 0.0
    %167 = vmatpush1.msra.mxu0 0.0
    %168 = vmatprep.mubr.f32.mxu0 0.0
    %169 = vmatmul.mubr.f32.gmra.mrb[0].mxu0 %v80
    %v170 = vpop.f32.mrb[0].mxu0
    %v171 = vadd.f32 %v102, %v170
    %v172 = vpop.f32.mrb[0].mxu0
    %173 = vdwg.mxu0
    %v174 = vmax.f32 %v171, 0.0
    %v175 = vld [vmem:[#allocation7] sm:$0xff]
    %v176 = vld [vmem:[#allocation7 + $0x8] sm:$0xff]
    %v177 = vld [vmem:[#allocation7 + $0x10] sm:$0xff]
    %v178 = vld [vmem:[#allocation7 + $0x18] sm:$0xff]
    %v179 = vld [vmem:[#allocation7 + $0x20] sm:$0xff]
    %v180 = vld [vmem:[#allocation7 + $0x28] sm:$0xff]
    %v181 = vld [vmem:[#allocation7 + $0x30] sm:$0xff]
    %v182 = vld [vmem:[#allocation7 + $0x38] sm:$0xff]
    %v183 = vld [vmem:[#allocation7 + $0x40] sm:$0xff]
    %v184 = vld [vmem:[#allocation7 + $0x48] sm:$0xff]
    %v185 = vld [vmem:[#allocation7 + $0x50] sm:$0xff]
    %v186 = vld [vmem:[#allocation7 + $0x58] sm:$0xff]
    %v187 = vld [vmem:[#allocation7 + $0x60] sm:$0xff]
    %v188 = vld [vmem:[#allocation7 + $0x68] sm:$0xff]
    %v189 = vld [vmem:[#allocation7 + $0x70] sm:$0xff]
    %v190 = vld [vmem:[#allocation7 + $0x78] sm:$0xff]
    %v191 = vld [vmem:[%s5] sm:$0x1]
    %v193 = vlaneseq
    %v194 = vshrl.u32 %v193, 7
    %v195 = vsub.s32 0, %v194
    %v196 = vrot.slane %v191, %v195
    %198 = vmatprep.subr.mxu0 0.0
    %199 = vmatpush1.msra.mxu0 %v175
    %200 = vmatprep.subr.mxu0 0.0
    %201 = vmatpush1.msra.mxu0 %v176
    %202 = vmatprep.subr.mxu0 0.0
    %203 = vmatpush1.msra.mxu0 %v177
    %204 = vmatprep.subr.mxu0 0.0
    %205 = vmatpush1.msra.mxu0 %v178
    %206 = vmatprep.subr.mxu0 0.0
    %207 = vmatpush1.msra.mxu0 %v179
    %208 = vmatprep.subr.mxu0 0.0
    %209 = vmatpush1.msra.mxu0 %v180
    %210 = vmatprep.subr.mxu0 0.0
    %211 = vmatpush1.msra.mxu0 %v181
    %212 = vmatprep.subr.mxu0 0.0
    %213 = vmatpush1.msra.mxu0 %v182
    %214 = vmatprep.subr.mxu0 0.0
    %215 = vmatpush1.msra.mxu0 %v183
    %216 = vmatprep.subr.mxu0 0.0
    %217 = vmatpush1.msra.mxu0 %v184
    %218 = vmatprep.subr.mxu0 0.0
    %219 = vmatpush1.msra.mxu0 %v185
    %220 = vmatprep.subr.mxu0 0.0
    %221 = vmatpush1.msra.mxu0 %v186
    %222 = vmatprep.subr.mxu0 0.0
    %223 = vmatpush1.msra.mxu0 %v187
    %224 = vmatprep.subr.mxu0 0.0
    %225 = vmatpush1.msra.mxu0 %v188
    %226 = vmatprep.subr.mxu0 0.0
    %227 = vmatpush1.msra.mxu0 %v189
    %228 = vmatprep.subr.mxu0 0.0
    %229 = vmatpush1.msra.mxu0 %v190
    %230 = vmatprep.subr.mxu0 0.0
    %231 = vmatpush1.msra.mxu0 0.0
    %232 = vmatprep.subr.mxu0 0.0
    %233 = vmatpush1.msra.mxu0 0.0
    %234 = vmatprep.subr.mxu0 0.0
    %235 = vmatpush1.msra.mxu0 0.0
    %236 = vmatprep.subr.mxu0 0.0
    %237 = vmatpush1.msra.mxu0 0.0
    %238 = vmatprep.subr.mxu0 0.0
    %239 = vmatpush1.msra.mxu0 0.0
    %240 = vmatprep.subr.mxu0 0.0
    %241 = vmatpush1.msra.mxu0 0.0
    %242 = vmatprep.subr.mxu0 0.0
    %243 = vmatpush1.msra.mxu0 0.0
    %244 = vmatprep.subr.mxu0 0.0
    %245 = vmatpush1.msra.mxu0 0.0
    %246 = vmatprep.subr.mxu0 0.0
    %247 = vmatpush1.msra.mxu0 0.0
    %248 = vmatprep.subr.mxu0 0.0
    %249 = vmatpush1.msra.mxu0 0.0
    %250 = vmatprep.subr.mxu0 0.0
    %251 = vmatpush1.msra.mxu0 0.0
    %252 = vmatprep.subr.mxu0 0.0
    %253 = vmatpush1.msra.mxu0 0.0
    %254 = vmatprep.subr.mxu0 0.0
    %255 = vmatpush1.msra.mxu0 0.0
    %256 = vmatprep.subr.mxu0 0.0
    %257 = vmatpush1.msra.mxu0 0.0
    %258 = vmatprep.subr.mxu0 0.0
    %259 = vmatpush1.msra.mxu0 0.0
    %260 = vmatprep.subr.mxu0 0.0
    %261 = vmatpush1.msra.mxu0 0.0
    %262 = vmatprep.mubr.f32.mxu0 0.0
    %263 = vmatmul.mubr.f32.gmra.mrb[0].mxu0 %v174
    %v264 = vpop.f32.mrb[0].mxu0
    %v265 = vadd.f32 %v196, %v264
    %v266 = vpop.f32.mrb[0].mxu0
    %267 = vdwg.mxu0
    %v268 = vmax.f32 %v265, 0.0
    %v269 = vld [vmem:[#allocation8] sm:$0xff]
    %v270 = vld [vmem:[#allocation8 + $0x8] sm:$0xff]
    %v271 = vld [vmem:[#allocation8 + $0x10] sm:$0xff]
    %v272 = vld [vmem:[#allocation8 + $0x18] sm:$0xff]
    %v273 = vld [vmem:[#allocation8 + $0x20] sm:$0xff]
    %v274 = vld [vmem:[#allocation8 + $0x28] sm:$0xff]
    %v275 = vld [vmem:[#allocation8 + $0x30] sm:$0xff]
    %v276 = vld [vmem:[#allocation8 + $0x38] sm:$0xff]
    %v277 = vld [vmem:[#allocation8 + $0x40] sm:$0xff]
    %v278 = vld [vmem:[#allocation8 + $0x48] sm:$0xff]
    %v279 = vld [vmem:[#allocation8 + $0x50] sm:$0xff]
    %v280 = vld [vmem:[#allocation8 + $0x58] sm:$0xff]
    %v281 = vld [vmem:[#allocation8 + $0x60] sm:$0xff]
    %v282 = vld [vmem:[#allocation8 + $0x68] sm:$0xff]
    %v283 = vld [vmem:[#allocation8 + $0x70] sm:$0xff]
    %v284 = vld [vmem:[#allocation8 + $0x78] sm:$0xff]
    %v285 = vld [vmem:[%s6] sm:$0x1]
    %v287 = vlaneseq
    %v288 = vshrl.u32 %v287, 7
    %v289 = vsub.s32 0, %v288
    %v290 = vrot.slane %v285, %v289
    %292 = vmatprep.subr.mxu0 0.0
    %293 = vmatpush1.msra.mxu0 %v269
    %294 = vmatprep.subr.mxu0 0.0
    %295 = vmatpush1.msra.mxu0 %v270
    %296 = vmatprep.subr.mxu0 0.0
    %297 = vmatpush1.msra.mxu0 %v271
    %298 = vmatprep.subr.mxu0 0.0
    %299 = vmatpush1.msra.mxu0 %v272
    %300 = vmatprep.subr.mxu0 0.0
    %301 = vmatpush1.msra.mxu0 %v273
    %302 = vmatprep.subr.mxu0 0.0
    %303 = vmatpush1.msra.mxu0 %v274
    %304 = vmatprep.subr.mxu0 0.0
    %305 = vmatpush1.msra.mxu0 %v275
    %306 = vmatprep.subr.mxu0 0.0
    %307 = vmatpush1.msra.mxu0 %v276
    %308 = vmatprep.subr.mxu0 0.0
    %309 = vmatpush1.msra.mxu0 %v277
    %310 = vmatprep.subr.mxu0 0.0
    %311 = vmatpush1.msra.mxu0 %v278
    %312 = vmatprep.subr.mxu0 0.0
    %313 = vmatpush1.msra.mxu0 %v279
    %314 = vmatprep.subr.mxu0 0.0
    %315 = vmatpush1.msra.mxu0 %v280
    %316 = vmatprep.subr.mxu0 0.0
    %317 = vmatpush1.msra.mxu0 %v281
    %318 = vmatprep.subr.mxu0 0.0
    %319 = vmatpush1.msra.mxu0 %v282
    %320 = vmatprep.subr.mxu0 0.0
    %321 = vmatpush1.msra.mxu0 %v283
    %322 = vmatprep.subr.mxu0 0.0
    %323 = vmatpush1.msra.mxu0 %v284
    %324 = vmatprep.subr.mxu0 0.0
    %325 = vmatpush1.msra.mxu0 0.0
    %326 = vmatprep.subr.mxu0 0.0
    %327 = vmatpush1.msra.mxu0 0.0
    %328 = vmatprep.subr.mxu0 0.0
    %329 = vmatpush1.msra.mxu0 0.0
    %330 = vmatprep.subr.mxu0 0.0
    %331 = vmatpush1.msra.mxu0 0.0
    %332 = vmatprep.subr.mxu0 0.0
    %333 = vmatpush1.msra.mxu0 0.0
    %334 = vmatprep.subr.mxu0 0.0
    %335 = vmatpush1.msra.mxu0 0.0
    %336 = vmatprep.subr.mxu0 0.0
    %337 = vmatpush1.msra.mxu0 0.0
    %338 = vmatprep.subr.mxu0 0.0
    %339 = vmatpush1.msra.mxu0 0.0
    %340 = vmatprep.subr.mxu0 0.0
    %341 = vmatpush1.msra.mxu0 0.0
    %342 = vmatprep.subr.mxu0 0.0
    %343 = vmatpush1.msra.mxu0 0.0
    %344 = vmatprep.subr.mxu0 0.0
    %345 = vmatpush1.msra.mxu0 0.0
    %346 = vmatprep.subr.mxu0 0.0
    %347 = vmatpush1.msra.mxu0 0.0
    %348 = vmatprep.subr.mxu0 0.0
    %349 = vmatpush1.msra.mxu0 0.0
    %350 = vmatprep.subr.mxu0 0.0
    %351 = vmatpush1.msra.mxu0 0.0
    %352 = vmatprep.subr.mxu0 0.0
    %353 = vmatpush1.msra.mxu0 0.0
    %354 = vmatprep.subr.mxu0 0.0
    %355 = vmatpush1.msra.mxu0 0.0
    %356 = vmatprep.mubr.f32.mxu0 0.0
    %357 = vmatmul.mubr.f32.gmra.mrb[0].mxu0 %v268
    %v358 = vpop.f32.mrb[0].mxu0
    %v359 = vadd.f32 %v290, %v358
    %v360 = vpop.f32.mrb[0].mxu0
    %361 = vdwg.mxu0
    %362 = vst [vmem:[#allocation10] sm:$0xff] %v359
    // Predicated region
    $region46: #{tpu_custom_call.1} parent=1 // pred_check
      _
    $region47: #{tpu_custom_call.1} parent=1 // pred_check_branch
      %364 = sbr.rel (0) target = $region49
    $region48: #{tpu_custom_call.1} parent=1 // pred_region
      %s366 = ssub.s32 128, 128
      %367 = vsyncadd [#allocation4], %s366
      %s369 = sshll.u32 [#allocation10], 4
      %s370 = int_to_ptr.vmem [resolvable:$true] %s369
      %372 = dma.vmem_to_hbm [thread:$0]  %s370, 128, %s7, [#allocation4]
    $region49: #{tpu_custom_call.1} parent=1 // pred_fallthru
      _
    // Predicated region
    $region50: #{tpu_custom_call.1} parent=1 // pred_check
      _
    $region51: #{tpu_custom_call.1} parent=1 // pred_check_branch
      %374 = sbr.rel (0) target = $region53
    $region52: #{tpu_custom_call.1} parent=1 // pred_region
      %375 = dma.done [#allocation4], 128
    $region53: #{tpu_custom_call.1} parent=1 // pred_fallthru
      _
    %376 = vsyncpa [#allocation3], 1
    %377 = vsyncpa [#allocation6], 1
    %378 = vsyncpa [#allocation9], 1
    %379 = vsyncpa [#allocation4], 1

</llo_original>
